<compile_context>
chip_gen: v7x
topology: tpu7x:2x2x1
jax: 0.10.0
libtpu: 0.0.40
codegen_flags: <defaults>
</compile_context>

<pallas_src>
import jax
import jax.numpy as jnp
from jax.experimental import pallas as pl
from jax.experimental.pallas import tpu as pltpu

_SUBLANE = 8  # vreg sublane height (second-to-last dim granularity)


def _round_up(x: int, m: int) -> int:
    return (x + m - 1) // m * m


def _cdiv(a: int, b: int) -> int:
    return (a + b - 1) // b


def _encoder_kernel(x_ref, w1_ref, b1_ref, w2_ref, b2_ref, o_ref):
    # Linear1 + ReLU:  [bm, D_in] @ [D_in, H] -> [bm, H]   (MXU, f32 accumulation)
    h = jnp.dot(x_ref[...], w1_ref[...], preferred_element_type=jnp.float32)
    h = jnp.maximum(h + b1_ref[...], 0.0)
    # Linear2 + tanh:  [bm, H] @ [H, D_out] -> [bm, D_out]
    y = jnp.dot(h, w2_ref[...], preferred_element_type=jnp.float32)
    o_ref[...] = jnp.tanh(y + b2_ref[...])


def init_encoder_params(key, d_in, h, d_out):
    """Same layout as torch.nn.Linear: w[out, in], b[out]; uniform(+-1/sqrt(fan_in))."""
    k1, k2, k3, k4 = jax.random.split(key, 4)
    bound1 = 1.0 / (d_in ** 0.5)
    bound2 = 1.0 / (h ** 0.5)
    return {
        "w1": jax.random.uniform(k1, (h, d_in), jnp.float32, -bound1, bound1),
        "b1": jax.random.uniform(k2, (h,), jnp.float32, -bound1, bound1),
        "w2": jax.random.uniform(k3, (d_out, h), jnp.float32, -bound2, bound2),
        "b2": jax.random.uniform(k4, (d_out,), jnp.float32, -bound2, bound2),
    }


def prepare_encoder_params(params):
    """One-time weight prep (hoisted out of the forward):
    transpose to (in, out) matmul layout and reshape biases to broadcastable rows."""
    return {
        "w1t": jnp.asarray(params["w1"], jnp.float32).T,              # (D_in, H)
        "b1": jnp.asarray(params["b1"], jnp.float32).reshape(1, -1),  # (1, H)
        "w2t": jnp.asarray(params["w2"], jnp.float32).T,              # (H, D_out)
        "b2": jnp.asarray(params["b2"], jnp.float32).reshape(1, -1),  # (1, D_out)
    }


def _choose_batch_tile(B: int):
    """Balanced batch tiles: multiple of 8 sublanes, ~1024-row target (step overhead
    dominates below that at these feature sizes), >=2 grid steps when B > 16 so both
    v7x TensorCores get work, and no near-2x over-padding for awkward batch sizes."""
    Bp = _round_up(B, _SUBLANE)
    n_tiles = max(_cdiv(Bp, 1024), 2 if Bp > 16 else 1)
    bm = _round_up(_cdiv(Bp, n_tiles), _SUBLANE)
    Bp = _round_up(Bp, bm)
    return bm, Bp


@jax.jit
def encoder_forward(x, prep):
    B, D_in = x.shape
    H = prep["w1t"].shape[1]
    D_out = prep["w2t"].shape[1]

    bm, Bp = _choose_batch_tile(B)
    xp = x if Bp == B else jnp.zeros((Bp, D_in), x.dtype).at[:B].set(x)

    out = pl.pallas_call(
        _encoder_kernel,
        out_shape=jax.ShapeDtypeStruct((Bp, D_out), jnp.float32),
        grid_spec=pltpu.PrefetchScalarGridSpec(
            num_scalar_prefetch=0,
            grid=(Bp // bm,),
            in_specs=[
                pl.BlockSpec((bm, D_in), lambda i: (i, 0)),   # x tile (pipelined over batch)
                pl.BlockSpec((D_in, H), lambda i: (0, 0)),    # w1^T (resident across tiles)
                pl.BlockSpec((1, H), lambda i: (0, 0)),       # b1
                pl.BlockSpec((H, D_out), lambda i: (0, 0)),   # w2^T
                pl.BlockSpec((1, D_out), lambda i: (0, 0)),   # b2
            ],
            out_specs=pl.BlockSpec((bm, D_out), lambda i: (i, 0)),
        ),
        compiler_params=pltpu.CompilerParams(
            dimension_semantics=("parallel",),
        ),
    )(xp, prep["w1t"], prep["b1"], prep["w2t"], prep["b2"])

    return out if Bp == B else out[:B]


if __name__ == "__main__":
    key = jax.random.PRNGKey(0)
    k_x, k_p = jax.random.split(key)

    # Small shapes consistent with the module: batch=8 (seq=8), D_in=32, H=32, D_out=16.
    B, D_in, H, D_out = 8, 32, 32, 16
    x = jax.random.normal(k_x, (B, D_in), jnp.float32)
    params = init_encoder_params(k_p, D_in, H, D_out)
    prep = prepare_encoder_params(params)   # one-time weight prep, NOT per forward

    y = encoder_forward(x, prep)
    jax.block_until_ready(y)

    # Pure-JAX reference of the PyTorch forward: tanh(relu(x W1^T + b1) W2^T + b2)
    ref = jnp.tanh(
        jnp.maximum(x @ params["w1"].T + params["b1"], 0.0) @ params["w2"].T + params["b2"]
    )

    assert y.shape == (B, D_out), y.shape
    assert bool(jnp.all(jnp.abs(y) <= 1.0))                  # tanh range
    assert bool(jnp.allclose(y, ref, atol=1e-5, rtol=1e-5))  # matches the module forward
    print("KERNEL_OK")
</pallas_src>

<mosaic_0001>
module attributes {stable_mosaic.version = 11 : i64} {
  func.func @_encoder_kernel(%arg0: i32, %arg1: memref<8x32xf32, #tpu.memory_space<vmem>>, %arg2: memref<32x32xf32, #tpu.memory_space<vmem>>, %arg3: memref<1x32xf32, #tpu.memory_space<vmem>>, %arg4: memref<32x16xf32, #tpu.memory_space<vmem>>, %arg5: memref<1x16xf32, #tpu.memory_space<vmem>>, %arg6: memref<8x16xf32, #tpu.memory_space<vmem>>) attributes {dimension_semantics = [#tpu.dimension_semantics<parallel>], iteration_bounds = array<i64: 1>, scalar_prefetch = 0 : i64, scratch_operands = 0 : i64, tpu.core_type = #tpu.core_type<tc>, window_params = [{transform_indices = @transform_0, window_bounds = array<i64: 8, 32>}, {pipeline_mode = #tpu.pipeline_mode<synchronous>, transform_indices = @transform_1, window_bounds = array<i64: 32, 32>}, {pipeline_mode = #tpu.pipeline_mode<synchronous>, transform_indices = @transform_2, window_bounds = array<i64: 1, 32>}, {pipeline_mode = #tpu.pipeline_mode<synchronous>, transform_indices = @transform_3, window_bounds = array<i64: 32, 16>}, {pipeline_mode = #tpu.pipeline_mode<synchronous>, transform_indices = @transform_4, window_bounds = array<i64: 1, 16>}, {transform_indices = @transform_5, window_bounds = array<i64: 8, 16>}]} {
    %c0 = arith.constant 0 : index
    %c0_0 = arith.constant 0 : index
    %0 = vector.load %arg1[%c0, %c0_0] : memref<8x32xf32, #tpu.memory_space<vmem>>, vector<8x32xf32>
    %c0_1 = arith.constant 0 : index
    %c0_2 = arith.constant 0 : index
    %1 = vector.load %arg2[%c0_1, %c0_2] : memref<32x32xf32, #tpu.memory_space<vmem>>, vector<32x32xf32>
    %cst = arith.constant dense<0.000000e+00> : vector<8x32xf32>
    %2 = tpu.matmul %0, %1, %cst {dimension_numbers = #tpu.dot_dimension_numbers<[1], [0], [0], [1], [0, 0, 1, 1], [], []>} : vector<8x32xf32>, vector<32x32xf32>, vector<8x32xf32> -> vector<8x32xf32>
    %c0_3 = arith.constant 0 : index
    %c0_4 = arith.constant 0 : index
    %3 = vector.load %arg3[%c0_3, %c0_4] : memref<1x32xf32, #tpu.memory_space<vmem>>, vector<1x32xf32>
    %4 = vector.broadcast %3 : vector<1x32xf32> to vector<8x32xf32>
    %5 = arith.addf %2, %4 : vector<8x32xf32>
    %cst_5 = arith.constant 0.000000e+00 : f32
    %6 = vector.broadcast %cst_5 : f32 to vector<8x32xf32>
    %7 = arith.maximumf %5, %6 : vector<8x32xf32>
    %c0_6 = arith.constant 0 : index
    %c0_7 = arith.constant 0 : index
    %8 = vector.load %arg4[%c0_6, %c0_7] : memref<32x16xf32, #tpu.memory_space<vmem>>, vector<32x16xf32>
    %cst_8 = arith.constant dense<0.000000e+00> : vector<8x16xf32>
    %9 = tpu.matmul %7, %8, %cst_8 {dimension_numbers = #tpu.dot_dimension_numbers<[1], [0], [0], [1], [0, 0, 1, 1], [], []>} : vector<8x32xf32>, vector<32x16xf32>, vector<8x16xf32> -> vector<8x16xf32>
    %c0_9 = arith.constant 0 : index
    %c0_10 = arith.constant 0 : index
    %10 = vector.load %arg5[%c0_9, %c0_10] : memref<1x16xf32, #tpu.memory_space<vmem>>, vector<1x16xf32>
    %11 = vector.broadcast %10 : vector<1x16xf32> to vector<8x16xf32>
    %12 = arith.addf %9, %11 : vector<8x16xf32>
    %13 = math.tanh %12 : vector<8x16xf32>
    %c0_11 = arith.constant 0 : index
    %c0_12 = arith.constant 0 : index
    %14 = vector.load %arg6[%c0_11, %c0_12] : memref<8x16xf32, #tpu.memory_space<vmem>>, vector<8x16xf32>
    tpu.vector_store %arg6[%c0_11, %c0_12], %13 {strides = array<i32>} : memref<8x16xf32, #tpu.memory_space<vmem>>, vector<8x16xf32>,
    return
  }
  func.func @transform_0(%arg0: i32) -> (i32, i32) {
    %c0_i32 = arith.constant 0 : i32
    %c0_i32_0 = arith.constant 0 : i32
    return %arg0, %c0_i32 : i32, i32
  }
  func.func @transform_1(%arg0: i32) -> (i32, i32) {
    %c0_i32 = arith.constant 0 : i32
    %c0_i32_0 = arith.constant 0 : i32
    %c0_i32_1 = arith.constant 0 : i32
    return %c0_i32, %c0_i32_0 : i32, i32
  }
  func.func @transform_2(%arg0: i32) -> (i32, i32) {
    %c0_i32 = arith.constant 0 : i32
    %c0_i32_0 = arith.constant 0 : i32
    %c0_i32_1 = arith.constant 0 : i32
    return %c0_i32, %c0_i32_0 : i32, i32
  }
  func.func @transform_3(%arg0: i32) -> (i32, i32) {
    %c0_i32 = arith.constant 0 : i32
    %c0_i32_0 = arith.constant 0 : i32
    %c0_i32_1 = arith.constant 0 : i32
    return %c0_i32, %c0_i32_0 : i32, i32
  }
  func.func @transform_4(%arg0: i32) -> (i32, i32) {
    %c0_i32 = arith.constant 0 : i32
    %c0_i32_0 = arith.constant 0 : i32
    %c0_i32_1 = arith.constant 0 : i32
    return %c0_i32, %c0_i32_0 : i32, i32
  }
  func.func @transform_5(%arg0: i32) -> (i32, i32) {
    %c0_i32 = arith.constant 0 : i32
    %c0_i32_0 = arith.constant 0 : i32
    return %arg0, %c0_i32 : i32, i32
  }
}

</mosaic_0001>

<llo_original>
// kernel: encoder_forward.1
$region0: #{encoder_forward.1}
  #allocation0 [shape = 'u32[]', space=smem, size = 0x4, offset = 0x4, fixed_abs, tag = 'smem constant byte address 0x4 - core index']
  #allocation1 [shape = 'u32[144,128]{1,0:T(1,128)}', space=vmem, size = 0x12000, scoped, tag = 'internal scratch']
  %s0 = inlined_call_operand.vmem [shape: f32[8,32], index: 0, kind: input, shape index: {}]
  %s1 = inlined_call_operand.vmem [shape: f32[32,32], index: 1, kind: input, shape index: {}]
  %s2 = inlined_call_operand.vmem [shape: f32[1,32], index: 2, kind: input, shape index: {}]
  %s3 = inlined_call_operand.vmem [shape: f32[32,16], index: 3, kind: input, shape index: {}]
  %s4 = inlined_call_operand.vmem [shape: f32[1,16], index: 4, kind: input, shape index: {}]
  %s5 = inlined_call_operand.hbm [shape: f32[8,16], index: 5, kind: output, shape index: {}]
  %s6 = sld [smem:[#allocation0]]
  $region30: #{encoder_forward.1} parent=0
    _
  %s8 = ssub.s32 1, %s6
  %s9 = scalar_select 0, %s8, %s6
  $region1: #{encoder_forward.1} parent=0
    #allocation2 [shape = 'u8[4096]{0}', space=vmem, size = 0x1000, scoped, tag = 'output window, operand 0, single buffered']
    #allocation3 [shape = 's32[1]{0}', space=sflag, size = 0x4, scoped, tag = 'scoped memory for encoder_forward.1']
    %10 = vsyncpa [#allocation3], 0
    // Predicated region
    $region2: #{encoder_forward.1} parent=1 // pred_check
      _
    $region3: #{encoder_forward.1} parent=1 // pred_check_branch
      %12 = sbr.rel (0) target = $region5
    $region4: #{encoder_forward.1} parent=1 // pred_region
      _
    $region5: #{encoder_forward.1} parent=1 // pred_fallthru
      _
    // Predicated region
    $region6: #{encoder_forward.1} parent=1 // pred_check
      _
    $region7: #{encoder_forward.1} parent=1 // pred_check_branch
      %14 = sbr.rel (0) target = $region9
    $region8: #{encoder_forward.1} parent=1 // pred_region
      _
    $region9: #{encoder_forward.1} parent=1 // pred_fallthru
      _
    // Predicated region
    $region10: #{encoder_forward.1} parent=1 // pred_check
      _
    $region11: #{encoder_forward.1} parent=1 // pred_check_branch
      %16 = sbr.rel (0) target = $region13
    $region12: #{encoder_forward.1} parent=1 // pred_region
      _
    $region13: #{encoder_forward.1} parent=1 // pred_fallthru
      _
    // Predicated region
    $region14: #{encoder_forward.1} parent=1 // pred_check
      _
    $region15: #{encoder_forward.1} parent=1 // pred_check_branch
      %18 = sbr.rel (0) target = $region17
    $region16: #{encoder_forward.1} parent=1 // pred_region
      _
    $region17: #{encoder_forward.1} parent=1 // pred_fallthru
      _
    // Predicated region
    $region18: #{encoder_forward.1} parent=1 // pred_check
      _
    $region19: #{encoder_forward.1} parent=1 // pred_check_branch
      %20 = sbr.rel (0) target = $region21
    $region20: #{encoder_forward.1} parent=1 // pred_region
      _
    $region21: #{encoder_forward.1} parent=1 // pred_fallthru
      _
    %v21 = vld [vmem:[%s0] sm:$0xff]
    %v22 = vld [vmem:[%s1] sm:$0xff]
    %v23 = vld [vmem:[%s1 + $0x8] sm:$0xff]
    %v24 = vld [vmem:[%s1 + $0x10] sm:$0xff]
    %v25 = vld [vmem:[%s1 + $0x18] sm:$0xff]
    %v26 = vld [vmem:[%s2] sm:$0x1]
    %v28 = vlaneseq
    %v29 = vshrl.u32 %v28, 7
    %v30 = vsub.s32 0, %v29
    %v31 = vrot.slane %v26, %v30
    %vm33 = vcmask 261120
    %v35 = vsel %vm33, %v21, 0
    %37 = vmatprep.subr.mxu0 0.0
    %38 = vmatpush1.msra.mxu0 %v22
    %39 = vmatprep.subr.mxu0 0.0
    %40 = vmatpush1.msra.mxu0 %v23
    %41 = vmatprep.subr.mxu0 0.0
    %42 = vmatpush1.msra.mxu0 %v24
    %43 = vmatprep.subr.mxu0 0.0
    %44 = vmatpush1.msra.mxu0 %v25
    %45 = vmatprep.subr.mxu0 0.0
    %46 = vmatpush1.msra.mxu0 0.0
    %47 = vmatprep.subr.mxu0 0.0
    %48 = vmatpush1.msra.mxu0 0.0
    %49 = vmatprep.subr.mxu0 0.0
    %50 = vmatpush1.msra.mxu0 0.0
    %51 = vmatprep.subr.mxu0 0.0
    %52 = vmatpush1.msra.mxu0 0.0
    %53 = vmatprep.subr.mxu0 0.0
    %54 = vmatpush1.msra.mxu0 0.0
    %55 = vmatprep.subr.mxu0 0.0
    %56 = vmatpush1.msra.mxu0 0.0
    %57 = vmatprep.subr.mxu0 0.0
    %58 = vmatpush1.msra.mxu0 0.0
    %59 = vmatprep.subr.mxu0 0.0
    %60 = vmatpush1.msra.mxu0 0.0
    %61 = vmatprep.subr.mxu0 0.0
    %62 = vmatpush1.msra.mxu0 0.0
    %63 = vmatprep.subr.mxu0 0.0
    %64 = vmatpush1.msra.mxu0 0.0
    %65 = vmatprep.subr.mxu0 0.0
    %66 = vmatpush1.msra.mxu0 0.0
    %67 = vmatprep.subr.mxu0 0.0
    %68 = vmatpush1.msra.mxu0 0.0
    %69 = vmatprep.subr.mxu0 0.0
    %70 = vmatpush1.msra.mxu0 0.0
    %71 = vmatprep.subr.mxu0 0.0
    %72 = vmatpush1.msra.mxu0 0.0
    %73 = vmatprep.subr.mxu0 0.0
    %74 = vmatpush1.msra.mxu0 0.0
    %75 = vmatprep.subr.mxu0 0.0
    %76 = vmatpush1.msra.mxu0 0.0
    %77 = vmatprep.subr.mxu0 0.0
    %78 = vmatpush1.msra.mxu0 0.0
    %79 = vmatprep.subr.mxu0 0.0
    %80 = vmatpush1.msra.mxu0 0.0
    %81 = vmatprep.subr.mxu0 0.0
    %82 = vmatpush1.msra.mxu0 0.0
    %83 = vmatprep.subr.mxu0 0.0
    %84 = vmatpush1.msra.mxu0 0.0
    %85 = vmatprep.subr.mxu0 0.0
    %86 = vmatpush1.msra.mxu0 0.0
    %87 = vmatprep.subr.mxu0 0.0
    %88 = vmatpush1.msra.mxu0 0.0
    %89 = vmatprep.subr.mxu0 0.0
    %90 = vmatpush1.msra.mxu0 0.0
    %91 = vmatprep.subr.mxu0 0.0
    %92 = vmatpush1.msra.mxu0 0.0
    %93 = vmatprep.subr.mxu0 0.0
    %94 = vmatpush1.msra.mxu0 0.0
    %95 = vmatprep.subr.mxu0 0.0
    %96 = vmatpush1.msra.mxu0 0.0
    %97 = vmatprep.subr.mxu0 0.0
    %98 = vmatpush1.msra.mxu0 0.0
    %99 = vmatprep.subr.mxu0 0.0
    %100 = vmatpush1.msra.mxu0 0.0
    %101 = vmatprep.mubr.f32.mxu0 0.0
    %102 = vmatmul.mubr.f32.gmra.mrb[0].mxu0 %v35
    %v103 = vpop.f32.mrb[0].mxu0
    %v104 = vadd.f32 %v31, %v103
    %v105 = vpop.f32.mrb[0].mxu0
    %106 = vdwg.mxu0
    %v107 = vmax.f32 %v104, 0.0
    %v108 = vld [vmem:[%s3] sm:$0xff]
    %v109 = vld [vmem:[%s3 + $0x8] sm:$0xff]
    %v110 = vld [vmem:[%s3 + $0x10] sm:$0xff]
    %v111 = vld [vmem:[%s3 + $0x18] sm:$0xff]
    %v112 = vld [vmem:[%s4] sm:$0x1]
    %v114 = vlaneseq
    %v115 = vshrl.u32 %v114, 7
    %v116 = vsub.s32 0, %v115
    %v117 = vrot.slane %v112, %v116
    %v120 = vsel %vm33, %v107, 0
    %122 = vmatprep.subr.mxu0 0.0
    %123 = vmatpush1.msra.mxu0 %v108
    %124 = vmatprep.subr.mxu0 0.0
    %125 = vmatpush1.msra.mxu0 %v109
    %126 = vmatprep.subr.mxu0 0.0
    %127 = vmatpush1.msra.mxu0 %v110
    %128 = vmatprep.subr.mxu0 0.0
    %129 = vmatpush1.msra.mxu0 %v111
    %130 = vmatprep.subr.mxu0 0.0
    %131 = vmatpush1.msra.mxu0 0.0
    %132 = vmatprep.subr.mxu0 0.0
    %133 = vmatpush1.msra.mxu0 0.0
    %134 = vmatprep.subr.mxu0 0.0
    %135 = vmatpush1.msra.mxu0 0.0
    %136 = vmatprep.subr.mxu0 0.0
    %137 = vmatpush1.msra.mxu0 0.0
    %138 = vmatprep.subr.mxu0 0.0
    %139 = vmatpush1.msra.mxu0 0.0
    %140 = vmatprep.subr.mxu0 0.0
    %141 = vmatpush1.msra.mxu0 0.0
    %142 = vmatprep.subr.mxu0 0.0
    %143 = vmatpush1.msra.mxu0 0.0
    %144 = vmatprep.subr.mxu0 0.0
    %145 = vmatpush1.msra.mxu0 0.0
    %146 = vmatprep.subr.mxu0 0.0
    %147 = vmatpush1.msra.mxu0 0.0
    %148 = vmatprep.subr.mxu0 0.0
    %149 = vmatpush1.msra.mxu0 0.0
    %150 = vmatprep.subr.mxu0 0.0
    %151 = vmatpush1.msra.mxu0 0.0
    %152 = vmatprep.subr.mxu0 0.0
    %153 = vmatpush1.msra.mxu0 0.0
    %154 = vmatprep.subr.mxu0 0.0
    %155 = vmatpush1.msra.mxu0 0.0
    %156 = vmatprep.subr.mxu0 0.0
    %157 = vmatpush1.msra.mxu0 0.0
    %158 = vmatprep.subr.mxu0 0.0
    %159 = vmatpush1.msra.mxu0 0.0
    %160 = vmatprep.subr.mxu0 0.0
    %161 = vmatpush1.msra.mxu0 0.0
    %162 = vmatprep.subr.mxu0 0.0
    %163 = vmatpush1.msra.mxu0 0.0
    %164 = vmatprep.subr.mxu0 0.0
    %165 = vmatpush1.msra.mxu0 0.0
    %166 = vmatprep.subr.mxu0 0.0
    %167 = vmatpush1.msra.mxu0 0.0
    %168 = vmatprep.subr.mxu0 0.0
    %169 = vmatpush1.msra.mxu0 0.0
    %170 = vmatprep.subr.mxu0 0.0
    %171 = vmatpush1.msra.mxu0 0.0
    %172 = vmatprep.subr.mxu0 0.0
    %173 = vmatpush1.msra.mxu0 0.0
    %174 = vmatprep.subr.mxu0 0.0
    %175 = vmatpush1.msra.mxu0 0.0
    %176 = vmatprep.subr.mxu0 0.0
    %177 = vmatpush1.msra.mxu0 0.0
    %178 = vmatprep.subr.mxu0 0.0
    %179 = vmatpush1.msra.mxu0 0.0
    %180 = vmatprep.subr.mxu0 0.0
    %181 = vmatpush1.msra.mxu0 0.0
    %182 = vmatprep.subr.mxu0 0.0
    %183 = vmatpush1.msra.mxu0 0.0
    %184 = vmatprep.subr.mxu0 0.0
    %185 = vmatpush1.msra.mxu0 0.0
    %186 = vmatprep.mubr.f32.mxu0 0.0
    %187 = vmatmul.mubr.f32.gmra.mrb[0].mxu0 %v120
    %v188 = vpop.f32.mrb[0].mxu0
    %v189 = vadd.f32 %v117, %v188
    %v190 = vpop.f32.mrb[0].mxu0
    %191 = vdwg.mxu0
    %v192 = vtanh.pop %v189
    %vm193 = vcmask 130048
    %194 = vst.msk [vmem:[#allocation2] sm:$0xff] %vm193, %v192
    // Predicated region
    $region22: #{encoder_forward.1} parent=1 // pred_check
      _
    $region23: #{encoder_forward.1} parent=1 // pred_check_branch
      %196 = sbr.rel (0) target = $region25
    $region24: #{encoder_forward.1} parent=1 // pred_region
      %s198 = ssub.s32 128, 128
      %199 = vsyncadd [#allocation3], %s198
      %s201 = sshll.u32 [#allocation2], 4
      %s202 = int_to_ptr.vmem [resolvable:$true] %s201
      %204 = dma.vmem_to_hbm [thread:$0]  %s202, 128, %s5, [#allocation3]
    $region25: #{encoder_forward.1} parent=1 // pred_fallthru
      _
    // Predicated region
    $region26: #{encoder_forward.1} parent=1 // pred_check
      _
    $region27: #{encoder_forward.1} parent=1 // pred_check_branch
      %206 = sbr.rel (0) target = $region29
    $region28: #{encoder_forward.1} parent=1 // pred_region
      %207 = dma.done [#allocation3], 128
    $region29: #{encoder_forward.1} parent=1 // pred_fallthru
      _
    %208 = vsyncpa [#allocation3], 1

</llo_original>
